<compile_context>
chip_gen: v6e
topology: v6e:2x2x1
jax: 0.10.0
libtpu: 0.0.40
codegen_flags: <defaults>
</compile_context>

<pallas_src>
import math

import jax
import jax.numpy as jnp
from jax.experimental import pallas as pl
from jax.experimental.pallas import tpu as pltpu

# Layer sizes implied by the PyTorch module.
DIMS = [2, 480, 240, 120, 64, 32, 10, 7]
N_LAYERS = len(DIMS) - 1


def _ceil_to(x, m):
    return ((x + m - 1) // m) * m


# Lane-dense padded output width of every layer (multiples of 128).
OUT_PAD = [_ceil_to(d, 128) for d in DIMS[1:]]        # [512,256,128,128,128,128,128]

# bf16 weight slab covers layers 1..6 only (layer 0 lives in the f32 params slab).
# Each layer li is stored as N_CHUNKS[li] column chunks of shape (K_PAD[li], 128),
# stacked along the row axis starting at CHUNK_OFF[li].
K_PAD = [None] + OUT_PAD[:-1]                         # contraction extent per layer
N_CHUNKS = [None] + [OUT_PAD[li] // 128 for li in range(1, N_LAYERS)]   # [_,2,1,1,1,1,1]
CHUNK_OFF = [None]
_off = 0
for _li in range(1, N_LAYERS):
    CHUNK_OFF.append(_off)
    _off += K_PAD[_li] * N_CHUNKS[_li]
TOTAL_W_ROWS = _off                                   # 1792 rows x 128 cols bf16 = 448 KB

# f32 small-params slab: rows 0..6 = biases (zero padded), rows 8..9 = layer-0 weight.
P_ROWS, P_COLS = 16, 512


def mlp_kernel(x_ref, w_ref, p_ref, o_ref):
    x = x_ref[...].astype(jnp.float32)                # (B, 2)
    p = p_ref[...]                                    # (16, 512) f32 params slab

    # ---- Layer 1 (K=2): two exact-f32 VPU scaled-row FMAs; skips a 2-deep MXU pass.
    w1 = p[8:10, :]                                   # (2, 512), cols >= 480 are 0
    h = jnp.maximum(
        x[:, 0:1] * w1[0:1, :] + x[:, 1:2] * w1[1:2, :] + p[0:1, :],
        0.0,
    )                                                 # (B, 512) f32; pad cols stay 0

    # ---- Layers 2..7 on the MXU: bf16 weights (128-wide column chunks), f32 acc.
    logits = None
    for li in range(1, N_LAYERS):
        k = K_PAD[li]
        hb = h.astype(jnp.bfloat16)                   # (B, k)
        cols = []
        for c in range(N_CHUNKS[li]):
            r0 = CHUNK_OFF[li] + c * k                # multiple of 128 -> tile aligned
            w = w_ref[r0:r0 + k, :]                   # bf16 (k, 128)
            cols.append(jnp.dot(hb, w, preferred_element_type=jnp.float32))
        acc = cols[0] if len(cols) == 1 else jnp.concatenate(cols, axis=-1)
        acc = acc + p[li:li + 1, 0:acc.shape[1]]      # bias (zero in padded cols)
        if li < N_LAYERS - 1:
            h = jnp.maximum(acc, 0.0)                 # ReLU (f32 VPU); pad cols stay 0
        else:
            logits = acc                              # (B, 128); cols >= 7 are exactly 0

    # ---- Softmax over dim=0 (the batch axis), as torch.nn.Softmax(dim=0).
    z = logits - jnp.max(logits, axis=0, keepdims=True)
    e = jnp.exp(z)
    o_ref[...] = (e / jnp.sum(e, axis=0, keepdims=True)).astype(o_ref.dtype)


def make_params(key):
    """Deterministic parameter init (PyTorch-Linear-style uniform bounds)."""
    params = []
    for i in range(N_LAYERS):
        fan_in, fan_out = DIMS[i], DIMS[i + 1]
        key, kw, kb = jax.random.split(key, 3)
        bound = 1.0 / math.sqrt(fan_in)
        # Stored as (in, out) so the kernel computes x @ W + b.
        w = jax.random.uniform(kw, (fan_in, fan_out), jnp.float32, -bound, bound)
        b = jax.random.uniform(kb, (fan_out,), jnp.float32, -bound, bound)
        params.append((w, b))
    return params


def pack_params(params):
    """Pack layers 2..7 weights into a compact bf16 column-chunk slab and all
    biases + the tiny layer-1 weight into one small f32 slab."""
    w_slab = jnp.zeros((TOTAL_W_ROWS, 128), jnp.bfloat16)
    p_slab = jnp.zeros((P_ROWS, P_COLS), jnp.float32)

    # Biases -> rows 0..6.
    for li, (_, b) in enumerate(params):
        p_slab = p_slab.at[li, :b.shape[0]].set(b)
    # Layer-0 weight (2, 480) exact f32 -> rows 8..9.
    w0 = params[0][0]
    p_slab = p_slab.at[8:10, :w0.shape[1]].set(w0)

    # Layers 1..6 as stacked 128-wide column chunks (bf16).
    for li in range(1, N_LAYERS):
        w = params[li][0].astype(jnp.bfloat16)        # (K, N)
        K, N = w.shape
        k_pad = K_PAD[li]
        for c in range(N_CHUNKS[li]):
            n_lo = c * 128
            n_hi = min(n_lo + 128, N)
            r0 = CHUNK_OFF[li] + c * k_pad
            w_slab = w_slab.at[r0:r0 + K, : n_hi - n_lo].set(w[:, n_lo:n_hi])
    return w_slab, p_slab


def net_forward(x, w_slab, p_slab):
    B = x.shape[0]
    vmem = pl.BlockSpec(memory_space=pltpu.MemorySpace.VMEM)
    out_pad = pl.pallas_call(
        mlp_kernel,
        out_shape=jax.ShapeDtypeStruct((B, OUT_PAD[-1]), jnp.float32),  # lane-dense (B,128)
        in_specs=[vmem, vmem, vmem],
        out_specs=vmem,
    )(x, w_slab, p_slab)
    return out_pad[:, :DIMS[-1]]                      # slice to (B, 7)


def net_forward_ref(x, params):
    """Plain-JAX reference mirroring the kernel numerics:
    layer 1 exact f32, layers 2..7 with bf16 operands + f32 accumulation."""
    w0, b0 = params[0]
    h = jnp.maximum(x @ w0 + b0, 0.0)
    for li in range(1, N_LAYERS):
        w, b = params[li]
        acc = jnp.dot(h.astype(jnp.bfloat16), w.astype(jnp.bfloat16),
                      preferred_element_type=jnp.float32) + b
        h = jnp.maximum(acc, 0.0) if li < N_LAYERS - 1 else acc
    z = h - jnp.max(h, axis=0, keepdims=True)
    e = jnp.exp(z)
    return e / jnp.sum(e, axis=0, keepdims=True)


if __name__ == "__main__":
    key = jax.random.PRNGKey(0)
    key, kx = jax.random.split(key)

    B = 8  # small batch; softmax is over dim=0 so the whole batch lives in one block
    x = jax.random.normal(kx, (B, DIMS[0]), jnp.float32)

    params = make_params(key)
    w_slab, p_slab = pack_params(params)

    out = net_forward(x, w_slab, p_slab)
    out = jax.block_until_ready(out)

    ref = net_forward_ref(x, params)
    assert out.shape == (B, DIMS[-1])
    assert jnp.allclose(out, ref, atol=1e-3, rtol=1e-3), "mismatch vs JAX reference"
    # Softmax(dim=0) parity: every output column sums to 1.
    assert jnp.allclose(jnp.sum(out, axis=0), jnp.ones((DIMS[-1],)), atol=1e-5)

    print("KERNEL_OK")
</pallas_src>

<mosaic_0001>
module attributes {stable_mosaic.version = 11 : i64} {
  func.func @mlp_kernel(%arg0: memref<8x2xf32, #tpu.memory_space<vmem>>, %arg1: memref<1792x128xbf16, #tpu.memory_space<vmem>>, %arg2: memref<16x512xf32, #tpu.memory_space<vmem>>, %arg3: memref<8x128xf32, #tpu.memory_space<vmem>>) attributes {dimension_semantics = [], scalar_prefetch = 0 : i64, scratch_operands = 0 : i64, tpu.core_type = #tpu.core_type<tc>} {
    %c0 = arith.constant 0 : index
    %c0_0 = arith.constant 0 : index
    %0 = vector.load %arg0[%c0, %c0_0] : memref<8x2xf32, #tpu.memory_space<vmem>>, vector<8x2xf32>
    %c0_1 = arith.constant 0 : index
    %c0_2 = arith.constant 0 : index
    %1 = vector.load %arg2[%c0_1, %c0_2] : memref<16x512xf32, #tpu.memory_space<vmem>>, vector<16x512xf32>
    %2 = vector.extract_strided_slice %1 {offsets = [8, 0], sizes = [2, 512], strides = [1, 1]} : vector<16x512xf32> to vector<2x512xf32>
    %3 = vector.extract_strided_slice %0 {offsets = [0, 0], sizes = [8, 1], strides = [1, 1]} : vector<8x2xf32> to vector<8x1xf32>
    %4 = vector.extract_strided_slice %2 {offsets = [0, 0], sizes = [1, 512], strides = [1, 1]} : vector<2x512xf32> to vector<1x512xf32>
    %5 = vector.broadcast %3 : vector<8x1xf32> to vector<8x512xf32>
    %6 = vector.broadcast %4 : vector<1x512xf32> to vector<8x512xf32>
    %7 = arith.mulf %5, %6 : vector<8x512xf32>
    %8 = vector.extract_strided_slice %0 {offsets = [0, 1], sizes = [8, 1], strides = [1, 1]} : vector<8x2xf32> to vector<8x1xf32>
    %9 = vector.extract_strided_slice %2 {offsets = [1, 0], sizes = [1, 512], strides = [1, 1]} : vector<2x512xf32> to vector<1x512xf32>
    %10 = vector.broadcast %8 : vector<8x1xf32> to vector<8x512xf32>
    %11 = vector.broadcast %9 : vector<1x512xf32> to vector<8x512xf32>
    %12 = arith.mulf %10, %11 : vector<8x512xf32>
    %13 = arith.addf %7, %12 : vector<8x512xf32>
    %14 = vector.extract_strided_slice %1 {offsets = [0, 0], sizes = [1, 512], strides = [1, 1]} : vector<16x512xf32> to vector<1x512xf32>
    %15 = vector.broadcast %14 : vector<1x512xf32> to vector<8x512xf32>
    %16 = arith.addf %13, %15 : vector<8x512xf32>
    %cst = arith.constant 0.000000e+00 : f32
    %17 = vector.broadcast %cst : f32 to vector<8x512xf32>
    %18 = arith.maximumf %16, %17 : vector<8x512xf32>
    %19 = arith.truncf %18 : vector<8x512xf32> to vector<8x512xbf16>
    %c0_3 = arith.constant 0 : index
    %c0_4 = arith.constant 0 : index
    %20 = vector.load %arg1[%c0_3, %c0_4] : memref<1792x128xbf16, #tpu.memory_space<vmem>>, vector<512x128xbf16>
    %cst_5 = arith.constant dense<0.000000e+00> : vector<8x128xf32>
    %21 = tpu.matmul %19, %20, %cst_5 {dimension_numbers = #tpu.dot_dimension_numbers<[1], [0], [0], [1], [0, 0, 1, 1], [], []>} : vector<8x512xbf16>, vector<512x128xbf16>, vector<8x128xf32> -> vector<8x128xf32>
    %c512 = arith.constant 512 : index
    %c0_6 = arith.constant 0 : index
    %22 = vector.load %arg1[%c512, %c0_6] : memref<1792x128xbf16, #tpu.memory_space<vmem>>, vector<512x128xbf16>
    %cst_7 = arith.constant dense<0.000000e+00> : vector<8x128xf32>
    %23 = tpu.matmul %19, %22, %cst_7 {dimension_numbers = #tpu.dot_dimension_numbers<[1], [0], [0], [1], [0, 0, 1, 1], [], []>} : vector<8x512xbf16>, vector<512x128xbf16>, vector<8x128xf32> -> vector<8x128xf32>
    %24 = tpu.concatenate %21, %23 in 1 : vector<8x128xf32>, vector<8x128xf32> -> vector<8x256xf32>
    %25 = vector.extract_strided_slice %1 {offsets = [1, 0], sizes = [1, 256], strides = [1, 1]} : vector<16x512xf32> to vector<1x256xf32>
    %26 = vector.broadcast %25 : vector<1x256xf32> to vector<8x256xf32>
    %27 = arith.addf %24, %26 : vector<8x256xf32>
    %cst_8 = arith.constant 0.000000e+00 : f32
    %28 = vector.broadcast %cst_8 : f32 to vector<8x256xf32>
    %29 = arith.maximumf %27, %28 : vector<8x256xf32>
    %30 = arith.truncf %29 : vector<8x256xf32> to vector<8x256xbf16>
    %c1024 = arith.constant 1024 : index
    %c0_9 = arith.constant 0 : index
    %31 = vector.load %arg1[%c1024, %c0_9] : memref<1792x128xbf16, #tpu.memory_space<vmem>>, vector<256x128xbf16>
    %cst_10 = arith.constant dense<0.000000e+00> : vector<8x128xf32>
    %32 = tpu.matmul %30, %31, %cst_10 {dimension_numbers = #tpu.dot_dimension_numbers<[1], [0], [0], [1], [0, 0, 1, 1], [], []>} : vector<8x256xbf16>, vector<256x128xbf16>, vector<8x128xf32> -> vector<8x128xf32>
    %33 = vector.extract_strided_slice %1 {offsets = [2, 0], sizes = [1, 128], strides = [1, 1]} : vector<16x512xf32> to vector<1x128xf32>
    %34 = vector.broadcast %33 : vector<1x128xf32> to vector<8x128xf32>
    %35 = arith.addf %32, %34 : vector<8x128xf32>
    %cst_11 = arith.constant 0.000000e+00 : f32
    %36 = vector.broadcast %cst_11 : f32 to vector<8x128xf32>
    %37 = arith.maximumf %35, %36 : vector<8x128xf32>
    %38 = arith.truncf %37 : vector<8x128xf32> to vector<8x128xbf16>
    %c1280 = arith.constant 1280 : index
    %c0_12 = arith.constant 0 : index
    %39 = vector.load %arg1[%c1280, %c0_12] : memref<1792x128xbf16, #tpu.memory_space<vmem>>, vector<128x128xbf16>
    %cst_13 = arith.constant dense<0.000000e+00> : vector<8x128xf32>
    %40 = tpu.matmul %38, %39, %cst_13 {dimension_numbers = #tpu.dot_dimension_numbers<[1], [0], [0], [1], [0, 0, 1, 1], [], []>} : vector<8x128xbf16>, vector<128x128xbf16>, vector<8x128xf32> -> vector<8x128xf32>
    %41 = vector.extract_strided_slice %1 {offsets = [3, 0], sizes = [1, 128], strides = [1, 1]} : vector<16x512xf32> to vector<1x128xf32>
    %42 = vector.broadcast %41 : vector<1x128xf32> to vector<8x128xf32>
    %43 = arith.addf %40, %42 : vector<8x128xf32>
    %cst_14 = arith.constant 0.000000e+00 : f32
    %44 = vector.broadcast %cst_14 : f32 to vector<8x128xf32>
    %45 = arith.maximumf %43, %44 : vector<8x128xf32>
    %46 = arith.truncf %45 : vector<8x128xf32> to vector<8x128xbf16>
    %c1408 = arith.constant 1408 : index
    %c0_15 = arith.constant 0 : index
    %47 = vector.load %arg1[%c1408, %c0_15] : memref<1792x128xbf16, #tpu.memory_space<vmem>>, vector<128x128xbf16>
    %cst_16 = arith.constant dense<0.000000e+00> : vector<8x128xf32>
    %48 = tpu.matmul %46, %47, %cst_16 {dimension_numbers = #tpu.dot_dimension_numbers<[1], [0], [0], [1], [0, 0, 1, 1], [], []>} : vector<8x128xbf16>, vector<128x128xbf16>, vector<8x128xf32> -> vector<8x128xf32>
    %49 = vector.extract_strided_slice %1 {offsets = [4, 0], sizes = [1, 128], strides = [1, 1]} : vector<16x512xf32> to vector<1x128xf32>
    %50 = vector.broadcast %49 : vector<1x128xf32> to vector<8x128xf32>
    %51 = arith.addf %48, %50 : vector<8x128xf32>
    %cst_17 = arith.constant 0.000000e+00 : f32
    %52 = vector.broadcast %cst_17 : f32 to vector<8x128xf32>
    %53 = arith.maximumf %51, %52 : vector<8x128xf32>
    %54 = arith.truncf %53 : vector<8x128xf32> to vector<8x128xbf16>
    %c1536 = arith.constant 1536 : index
    %c0_18 = arith.constant 0 : index
    %55 = vector.load %arg1[%c1536, %c0_18] : memref<1792x128xbf16, #tpu.memory_space<vmem>>, vector<128x128xbf16>
    %cst_19 = arith.constant dense<0.000000e+00> : vector<8x128xf32>
    %56 = tpu.matmul %54, %55, %cst_19 {dimension_numbers = #tpu.dot_dimension_numbers<[1], [0], [0], [1], [0, 0, 1, 1], [], []>} : vector<8x128xbf16>, vector<128x128xbf16>, vector<8x128xf32> -> vector<8x128xf32>
    %57 = vector.extract_strided_slice %1 {offsets = [5, 0], sizes = [1, 128], strides = [1, 1]} : vector<16x512xf32> to vector<1x128xf32>
    %58 = vector.broadcast %57 : vector<1x128xf32> to vector<8x128xf32>
    %59 = arith.addf %56, %58 : vector<8x128xf32>
    %cst_20 = arith.constant 0.000000e+00 : f32
    %60 = vector.broadcast %cst_20 : f32 to vector<8x128xf32>
    %61 = arith.maximumf %59, %60 : vector<8x128xf32>
    %62 = arith.truncf %61 : vector<8x128xf32> to vector<8x128xbf16>
    %c1664 = arith.constant 1664 : index
    %c0_21 = arith.constant 0 : index
    %63 = vector.load %arg1[%c1664, %c0_21] : memref<1792x128xbf16, #tpu.memory_space<vmem>>, vector<128x128xbf16>
    %cst_22 = arith.constant dense<0.000000e+00> : vector<8x128xf32>
    %64 = tpu.matmul %62, %63, %cst_22 {dimension_numbers = #tpu.dot_dimension_numbers<[1], [0], [0], [1], [0, 0, 1, 1], [], []>} : vector<8x128xbf16>, vector<128x128xbf16>, vector<8x128xf32> -> vector<8x128xf32>
    %65 = vector.extract_strided_slice %1 {offsets = [6, 0], sizes = [1, 128], strides = [1, 1]} : vector<16x512xf32> to vector<1x128xf32>
    %66 = vector.broadcast %65 : vector<1x128xf32> to vector<8x128xf32>
    %67 = arith.addf %64, %66 : vector<8x128xf32>
    %cst_23 = arith.constant dense<0xFF800000> : vector<128xf32>
    %68 = vector.multi_reduction <maximumf>, %67, %cst_23 [0] : vector<8x128xf32> to vector<128xf32>
    %69 = vector.shape_cast %68 : vector<128xf32> to vector<1x128xf32>
    %70 = vector.broadcast %69 : vector<1x128xf32> to vector<8x128xf32>
    %71 = arith.subf %67, %70 : vector<8x128xf32>
    %72 = math.exp %71 : vector<8x128xf32>
    %cst_24 = arith.constant dense<0.000000e+00> : vector<128xf32>
    %73 = vector.multi_reduction <add>, %72, %cst_24 [0] : vector<8x128xf32> to vector<128xf32>
    %74 = vector.shape_cast %73 : vector<128xf32> to vector<1x128xf32>
    %75 = vector.broadcast %74 : vector<1x128xf32> to vector<8x128xf32>
    %76 = arith.divf %72, %75 : vector<8x128xf32>
    %c0_25 = arith.constant 0 : index
    %c0_26 = arith.constant 0 : index
    %77 = vector.load %arg3[%c0_25, %c0_26] : memref<8x128xf32, #tpu.memory_space<vmem>>, vector<8x128xf32>
    tpu.vector_store %arg3[%c0_25, %c0_26], %76 {strides = array<i32>} : memref<8x128xf32, #tpu.memory_space<vmem>>, vector<8x128xf32>,
    return
  }
}

</mosaic_0001>

<llo_original>
// kernel: tpu_custom_call.1
$region0: #{tpu_custom_call.1}
  #allocation0 [shape = 'u32[]', space=smem, size = 0x4, offset = 0x4, fixed_abs, tag = 'smem constant byte address 0x4 - core index']
  #allocation1 [shape = 'u32[144,128]{1,0:T(1,128)}', space=vmem, size = 0x12000, scoped, tag = 'internal scratch']
  %s0 = inlined_call_operand.vmem [shape: f32[8,2], index: 0, kind: input, shape index: {}]
  %s1 = inlined_call_operand.hbm [shape: bf16[1792,128], index: 1, kind: input, shape index: {}]
  %s2 = inlined_call_operand.hbm [shape: f32[16,512], index: 2, kind: input, shape index: {}]
  %s3 = inlined_call_operand.hbm [shape: f32[8,128], index: 3, kind: output, shape index: {}]
  %s4 = sld [smem:[#allocation0]]
  $region30: #{tpu_custom_call.1} parent=0
    _
  %s6 = ssub.s32 1, %s4
  %s7 = scalar_select 0, %s6, %s4
  $region1: #{tpu_custom_call.1} parent=0
    #allocation2 [shape = 'u8[458752]{0}', space=vmem, size = 0x70000, scoped, tag = 'input window, operand 1, single buffered']
    #allocation3 [shape = 's32[1]{0}', space=sflag, size = 0x4, scoped, tag = 'scoped memory for tpu_custom_call.1']
    #allocation4 [shape = 's32[1]{0}', space=sflag, size = 0x4, scoped, tag = 'scoped memory for tpu_custom_call.1']
    #allocation5 [shape = 'u8[32768]{0}', space=vmem, size = 0x8000, scoped, tag = 'input window, operand 2, single buffered']
    #allocation6 [shape = 's32[1]{0}', space=sflag, size = 0x4, scoped, tag = 'scoped memory for tpu_custom_call.1']
    #allocation7 [shape = 'u8[4096]{0}', space=vmem, size = 0x1000, scoped, tag = 'output window, operand 0, single buffered']
    %8 = vsyncpa [#allocation3], 0
    %9 = vsyncpa [#allocation6], 0
    %10 = vsyncpa [#allocation4], 0
    // Predicated region
    $region2: #{tpu_custom_call.1} parent=1 // pred_check
      _
    $region3: #{tpu_custom_call.1} parent=1 // pred_check_branch
      %12 = sbr.rel (0) target = $region5
    $region4: #{tpu_custom_call.1} parent=1 // pred_region
      _
    $region5: #{tpu_custom_call.1} parent=1 // pred_fallthru
      _
    // Predicated region
    $region6: #{tpu_custom_call.1} parent=1 // pred_check
      _
    $region7: #{tpu_custom_call.1} parent=1 // pred_check_branch
      %14 = sbr.rel (0) target = $region9
    $region8: #{tpu_custom_call.1} parent=1 // pred_region
      %s16 = ssub.s32 14336, 14336
      %17 = vsyncadd [#allocation3], %s16
      %s18 = sshll.u32 [#allocation2], 4
      %s19 = int_to_ptr.vmem [resolvable:$true] %s18
      %24 = dma.hbm_to_vmem [thread:$0]  %s1, 14336, %s19, [#allocation3], 64, 64, 4
    $region9: #{tpu_custom_call.1} parent=1 // pred_fallthru
      _
    // Predicated region
    $region10: #{tpu_custom_call.1} parent=1 // pred_check
      _
    $region11: #{tpu_custom_call.1} parent=1 // pred_check_branch
      %26 = sbr.rel (0) target = $region13
    $region12: #{tpu_custom_call.1} parent=1 // pred_region
      %s28 = ssub.s32 1024, 1024
      %29 = vsyncadd [#allocation6], %s28
      %s30 = sshll.u32 [#allocation5], 4
      %s31 = int_to_ptr.vmem [resolvable:$true] %s30
      %36 = dma.hbm_to_vmem [thread:$0]  %s2, 1024, %s31, [#allocation6], 512, 512, 32
    $region13: #{tpu_custom_call.1} parent=1 // pred_fallthru
      _
    // Predicated region
    $region14: #{tpu_custom_call.1} parent=1 // pred_check
      _
    $region15: #{tpu_custom_call.1} parent=1 // pred_check_branch
      %38 = sbr.rel (0) target = $region17
    $region16: #{tpu_custom_call.1} parent=1 // pred_region
      %39 = dma.done [#allocation3], 14336
    $region17: #{tpu_custom_call.1} parent=1 // pred_fallthru
      _
    // Predicated region
    $region18: #{tpu_custom_call.1} parent=1 // pred_check
      _
    $region19: #{tpu_custom_call.1} parent=1 // pred_check_branch
      %41 = sbr.rel (0) target = $region21
    $region20: #{tpu_custom_call.1} parent=1 // pred_region
      %42 = dma.done [#allocation6], 1024
    $region21: #{tpu_custom_call.1} parent=1 // pred_fallthru
      _
    %v44 = vld [vmem:[%s0] sm:$0xff]
    %v45 = vld [vmem:[#allocation5] sm:$0xff]
    %v46 = vld [vmem:[#allocation5 + $0x8] sm:$0xff]
    %v47 = vld [vmem:[#allocation5 + $0x10] sm:$0xff]
    %v48 = vld [vmem:[#allocation5 + $0x18] sm:$0xff]
    %v49 = vld [vmem:[#allocation5 + $0x20] sm:$0xff]
    %v50 = vld [vmem:[#allocation5 + $0x28] sm:$0xff]
    %v51 = vld [vmem:[#allocation5 + $0x30] sm:$0xff]
    %v52 = vld [vmem:[#allocation5 + $0x38] sm:$0xff]
    %54 = vset.pattern.permute.xlu0 0
    %55 = vperm.xlu0 %54, %v44
    %v56 = vpop.permute.xlu0 %55
    %v58 = vlaneseq
    %v59 = vshrl.u32 %v58, 7
    %v60 = vsub.s32 0, %v59
    %v61 = vrot.slane %v49, %v60
    %v62 = vlaneseq
    %v63 = vshrl.u32 %v62, 7
    %v64 = vsub.s32 0, %v63
    %v65 = vrot.slane %v50, %v64
    %v66 = vlaneseq
    %v67 = vshrl.u32 %v66, 7
    %v68 = vsub.s32 0, %v67
    %v69 = vrot.slane %v51, %v68
    %v70 = vlaneseq
    %v71 = vshrl.u32 %v70, 7
    %v72 = vsub.s32 0, %v71
    %v73 = vrot.slane %v52, %v72
    %v74 = vmul.f32 %v56, %v61
    %v75 = vmul.f32 %v56, %v65
    %v76 = vmul.f32 %v56, %v69
    %v77 = vmul.f32 %v56, %v73
    %78 = vset.pattern.permute.xlu0 1
    %79 = vperm.xlu0 %78, %v44
    %v80 = vpop.permute.xlu0 %79
    %v82 = vlaneseq
    %v83 = vshrl.u32 %v82, 7
    %v84 = vsub.s32 1, %v83
    %v85 = vrot.slane %v49, %v84
    %v86 = vlaneseq
    %v87 = vshrl.u32 %v86, 7
    %v88 = vsub.s32 1, %v87
    %v89 = vrot.slane %v50, %v88
    %v90 = vlaneseq
    %v91 = vshrl.u32 %v90, 7
    %v92 = vsub.s32 1, %v91
    %v93 = vrot.slane %v51, %v92
    %v94 = vlaneseq
    %v95 = vshrl.u32 %v94, 7
    %v96 = vsub.s32 1, %v95
    %v97 = vrot.slane %v52, %v96
    %v98 = vmul.f32 %v80, %v85
    %v99 = vmul.f32 %v80, %v89
    %v100 = vmul.f32 %v80, %v93
    %v101 = vmul.f32 %v80, %v97
    %v102 = vadd.f32 %v74, %v98
    %v103 = vadd.f32 %v75, %v99
    %v104 = vadd.f32 %v76, %v100
    %v105 = vadd.f32 %v77, %v101
    %v106 = vlaneseq
    %v107 = vshrl.u32 %v106, 7
    %v108 = vsub.s32 0, %v107
    %v109 = vrot.slane %v45, %v108
    %v110 = vlaneseq
    %v111 = vshrl.u32 %v110, 7
    %v112 = vsub.s32 0, %v111
    %v113 = vrot.slane %v46, %v112
    %v114 = vlaneseq
    %v115 = vshrl.u32 %v114, 7
    %v116 = vsub.s32 0, %v115
    %v117 = vrot.slane %v47, %v116
    %v118 = vlaneseq
    %v119 = vshrl.u32 %v118, 7
    %v120 = vsub.s32 0, %v119
    %v121 = vrot.slane %v48, %v120
    %v122 = vadd.f32 %v102, %v109
    %v123 = vadd.f32 %v103, %v113
    %v124 = vadd.f32 %v104, %v117
    %v125 = vadd.f32 %v105, %v121
    %v126 = vmax.f32 %v122, 0.0
    %v127 = vmax.f32 %v123, 0.0
    %v128 = vmax.f32 %v124, 0.0
    %v129 = vmax.f32 %v125, 0.0
    %v130 = vpack.c.bf16 %v126, %v126
    %v131 = vpack.c.bf16 %v127, %v127
    %v132 = vpack.c.bf16 %v128, %v128
    %v133 = vpack.c.bf16 %v129, %v129
    %v134 = vld [vmem:[#allocation2] sm:$0xf]
    %v135 = vld [vmem:[#allocation2 + $0x4] sm:$0xf]
    %v136 = vld [vmem:[#allocation2 + $0x8] sm:$0xf]
    %v137 = vld [vmem:[#allocation2 + $0xc] sm:$0xf]
    %v138 = vld [vmem:[#allocation2 + $0x10] sm:$0xf]
    %v139 = vld [vmem:[#allocation2 + $0x14] sm:$0xf]
    %v140 = vld [vmem:[#allocation2 + $0x18] sm:$0xf]
    %v141 = vld [vmem:[#allocation2 + $0x1c] sm:$0xf]
    %v142 = vld [vmem:[#allocation2 + $0x20] sm:$0xf]
    %v143 = vld [vmem:[#allocation2 + $0x24] sm:$0xf]
    %v144 = vld [vmem:[#allocation2 + $0x28] sm:$0xf]
    %v145 = vld [vmem:[#allocation2 + $0x2c] sm:$0xf]
    %v146 = vld [vmem:[#allocation2 + $0x30] sm:$0xf]
    %v147 = vld [vmem:[#allocation2 + $0x34] sm:$0xf]
    %v148 = vld [vmem:[#allocation2 + $0x38] sm:$0xf]
    %v149 = vld [vmem:[#allocation2 + $0x3c] sm:$0xf]
    %v150 = vld [vmem:[#allocation2 + $0x40] sm:$0xf]
    %v151 = vld [vmem:[#allocation2 + $0x44] sm:$0xf]
    %v152 = vld [vmem:[#allocation2 + $0x48] sm:$0xf]
    %v153 = vld [vmem:[#allocation2 + $0x4c] sm:$0xf]
    %v154 = vld [vmem:[#allocation2 + $0x50] sm:$0xf]
    %v155 = vld [vmem:[#allocation2 + $0x54] sm:$0xf]
    %v156 = vld [vmem:[#allocation2 + $0x58] sm:$0xf]
    %v157 = vld [vmem:[#allocation2 + $0x5c] sm:$0xf]
    %v158 = vld [vmem:[#allocation2 + $0x60] sm:$0xf]
    %v159 = vld [vmem:[#allocation2 + $0x64] sm:$0xf]
    %v160 = vld [vmem:[#allocation2 + $0x68] sm:$0xf]
    %v161 = vld [vmem:[#allocation2 + $0x6c] sm:$0xf]
    %v162 = vld [vmem:[#allocation2 + $0x70] sm:$0xf]
    %v163 = vld [vmem:[#allocation2 + $0x74] sm:$0xf]
    %v164 = vld [vmem:[#allocation2 + $0x78] sm:$0xf]
    %v165 = vld [vmem:[#allocation2 + $0x7c] sm:$0xf]
    %v166 = vld [vmem:[#allocation2 + $0x80] sm:$0xf]
    %v167 = vld [vmem:[#allocation2 + $0x84] sm:$0xf]
    %v168 = vld [vmem:[#allocation2 + $0x88] sm:$0xf]
    %v169 = vld [vmem:[#allocation2 + $0x8c] sm:$0xf]
    %v170 = vld [vmem:[#allocation2 + $0x90] sm:$0xf]
    %v171 = vld [vmem:[#allocation2 + $0x94] sm:$0xf]
    %v172 = vld [vmem:[#allocation2 + $0x98] sm:$0xf]
    %v173 = vld [vmem:[#allocation2 + $0x9c] sm:$0xf]
    %v174 = vld [vmem:[#allocation2 + $0xa0] sm:$0xf]
    %v175 = vld [vmem:[#allocation2 + $0xa4] sm:$0xf]
    %v176 = vld [vmem:[#allocation2 + $0xa8] sm:$0xf]
    %v177 = vld [vmem:[#allocation2 + $0xac] sm:$0xf]
    %v178 = vld [vmem:[#allocation2 + $0xb0] sm:$0xf]
    %v179 = vld [vmem:[#allocation2 + $0xb4] sm:$0xf]
    %v180 = vld [vmem:[#allocation2 + $0xb8] sm:$0xf]
    %v181 = vld [vmem:[#allocation2 + $0xbc] sm:$0xf]
    %v182 = vld [vmem:[#allocation2 + $0xc0] sm:$0xf]
    %v183 = vld [vmem:[#allocation2 + $0xc4] sm:$0xf]
    %v184 = vld [vmem:[#allocation2 + $0xc8] sm:$0xf]
    %v185 = vld [vmem:[#allocation2 + $0xcc] sm:$0xf]
    %v186 = vld [vmem:[#allocation2 + $0xd0] sm:$0xf]
    %v187 = vld [vmem:[#allocation2 + $0xd4] sm:$0xf]
    %v188 = vld [vmem:[#allocation2 + $0xd8] sm:$0xf]
    %v189 = vld [vmem:[#allocation2 + $0xdc] sm:$0xf]
    %v190 = vld [vmem:[#allocation2 + $0xe0] sm:$0xf]
    %v191 = vld [vmem:[#allocation2 + $0xe4] sm:$0xf]
    %v192 = vld [vmem:[#allocation2 + $0xe8] sm:$0xf]
    %v193 = vld [vmem:[#allocation2 + $0xec] sm:$0xf]
    %v194 = vld [vmem:[#allocation2 + $0xf0] sm:$0xf]
    %v195 = vld [vmem:[#allocation2 + $0xf4] sm:$0xf]
    %v196 = vld [vmem:[#allocation2 + $0xf8] sm:$0xf]
    %v197 = vld [vmem:[#allocation2 + $0xfc] sm:$0xf]
    %v262 = vunpack.c.l.b16 %v134
    %v263 = vunpack.c.l.b16 %v135
    %v264 = vunpack.c.l.b16 %v136
    %v265 = vunpack.c.l.b16 %v137
    %v266 = vunpack.c.l.b16 %v138
    %v267 = vunpack.c.l.b16 %v139
    %v268 = vunpack.c.l.b16 %v140
    %v269 = vunpack.c.l.b16 %v141
    %v270 = vunpack.c.l.b16 %v142
    %v271 = vunpack.c.l.b16 %v143
    %v272 = vunpack.c.l.b16 %v144
    %v273 = vunpack.c.l.b16 %v145
    %v274 = vunpack.c.l.b16 %v146
    %v275 = vunpack.c.l.b16 %v147
    %v276 = vunpack.c.l.b16 %v148
    %v277 = vunpack.c.l.b16 %v149
    %v278 = vunpack.c.l.b16 %v150
    %v279 = vunpack.c.l.b16 %v151
    %v280 = vunpack.c.l.b16 %v152
    %v281 = vunpack.c.l.b16 %v153
    %v282 = vunpack.c.l.b16 %v154
    %v283 = vunpack.c.l.b16 %v155
    %v284 = vunpack.c.l.b16 %v156
    %v285 = vunpack.c.l.b16 %v157
    %v286 = vunpack.c.l.b16 %v158
    %v287 = vunpack.c.l.b16 %v159
    %v288 = vunpack.c.l.b16 %v160
    %v289 = vunpack.c.l.b16 %v161
    %v290 = vunpack.c.l.b16 %v162
    %v291 = vunpack.c.l.b16 %v163
    %v292 = vunpack.c.l.b16 %v164
    %v293 = vunpack.c.l.b16 %v165
    %v294 = vunpack.c.l.b16 %v166
    %v295 = vunpack.c.l.b16 %v167
    %v296 = vunpack.c.l.b16 %v168
    %v297 = vunpack.c.l.b16 %v169
    %v298 = vunpack.c.l.b16 %v170
    %v299 = vunpack.c.l.b16 %v171
    %v300 = vunpack.c.l.b16 %v172
    %v301 = vunpack.c.l.b16 %v173
    %v302 = vunpack.c.l.b16 %v174
    %v303 = vunpack.c.l.b16 %v175
    %v304 = vunpack.c.l.b16 %v176
    %v305 = vunpack.c.l.b16 %v177
    %v306 = vunpack.c.l.b16 %v178
    %v307 = vunpack.c.l.b16 %v179
    %v308 = vunpack.c.l.b16 %v180
    %v309 = vunpack.c.l.b16 %v181
    %v310 = vunpack.c.l.b16 %v182
    %v311 = vunpack.c.l.b16 %v183
    %v312 = vunpack.c.l.b16 %v184
    %v313 = vunpack.c.l.b16 %v185
    %v314 = vunpack.c.l.b16 %v186
    %v315 = vunpack.c.l.b16 %v187
    %v316 = vunpack.c.l.b16 %v188
    %v317 = vunpack.c.l.b16 %v189
    %v318 = vunpack.c.l.b16 %v190
    %v319 = vunpack.c.l.b16 %v191
    %v320 = vunpack.c.l.b16 %v192
    %v321 = vunpack.c.l.b16 %v193
    %v322 = vunpack.c.l.b16 %v194
    %v323 = vunpack.c.l.b16 %v195
    %v324 = vunpack.c.l.b16 %v196
    %v325 = vunpack.c.l.b16 %v197
    %v326 = vpack.c.b16 %v263, %v262
    %v327 = vpack.c.b16 %v265, %v264
    %v328 = vpack.c.b16 %v267, %v266
    %v329 = vpack.c.b16 %v269, %v268
    %v330 = vpack.c.b16 %v271, %v270
    %v331 = vpack.c.b16 %v273, %v272
    %v332 = vpack.c.b16 %v275, %v274
    %v333 = vpack.c.b16 %v277, %v276
    %v334 = vpack.c.b16 %v279, %v278
    %v335 = vpack.c.b16 %v281, %v280
    %v336 = vpack.c.b16 %v283, %v282
    %v337 = vpack.c.b16 %v285, %v284
    %v338 = vpack.c.b16 %v287, %v286
    %v339 = vpack.c.b16 %v289, %v288
    %v340 = vpack.c.b16 %v291, %v290
    %v341 = vpack.c.b16 %v293, %v292
    %v342 = vpack.c.b16 %v295, %v294
    %v343 = vpack.c.b16 %v297, %v296
    %v344 = vpack.c.b16 %v299, %v298
    %v345 = vpack.c.b16 %v301, %v300
    %v346 = vpack.c.b16 %v303, %v302
    %v347 = vpack.c.b16 %v305, %v304
    %v348 = vpack.c.b16 %v307, %v306
    %v349 = vpack.c.b16 %v309, %v308
    %v350 = vpack.c.b16 %v311, %v310
    %v351 = vpack.c.b16 %v313, %v312
    %v352 = vpack.c.b16 %v315, %v314
    %v353 = vpack.c.b16 %v317, %v316
    %v354 = vpack.c.b16 %v319, %v318
    %v355 = vpack.c.b16 %v321, %v320
    %v356 = vpack.c.b16 %v323, %v322
    %v357 = vpack.c.b16 %v325, %v324
    %390 = vmatprep.subr.bf16.mxu0 0
    %391 = vmatpush1.bf16.msra.mxu0 %v333
    %392 = vmatprep.subr.bf16.mxu0 0
    %393 = vmatpush1.bf16.msra.mxu0 %v332
    %394 = vmatprep.subr.bf16.mxu0 0
    %395 = vmatpush1.bf16.msra.mxu0 %v331
    %396 = vmatprep.subr.bf16.mxu0 0
    %397 = vmatpush1.bf16.msra.mxu0 %v330
    %398 = vmatprep.subr.bf16.mxu0 0
    %399 = vmatpush1.bf16.msra.mxu0 %v329
    %400 = vmatprep.subr.bf16.mxu0 0
    %401 = vmatpush1.bf16.msra.mxu0 %v328
    %402 = vmatprep.subr.bf16.mxu0 0
    %403 = vmatpush1.bf16.msra.mxu0 %v327
    %404 = vmatprep.subr.bf16.mxu0 0
    %405 = vmatpush1.bf16.msra.mxu0 %v326
    %406 = vmatprep.subr.bf16.mxu0 0
    %407 = vmatpush2.bf16.msra.mxu0 %v341
    %408 = vmatprep.subr.bf16.mxu0 0
    %409 = vmatpush2.bf16.msra.mxu0 %v340
    %410 = vmatprep.subr.bf16.mxu0 0
    %411 = vmatpush2.bf16.msra.mxu0 %v339
    %412 = vmatprep.subr.bf16.mxu0 0
    %413 = vmatpush2.bf16.msra.mxu0 %v338
    %414 = vmatprep.subr.bf16.mxu0 0
    %415 = vmatpush2.bf16.msra.mxu0 %v337
    %416 = vmatprep.subr.bf16.mxu0 0
    %417 = vmatpush2.bf16.msra.mxu0 %v336
    %418 = vmatprep.subr.bf16.mxu0 0
    %419 = vmatpush2.bf16.msra.mxu0 %v335
    %420 = vmatprep.subr.bf16.mxu0 0
    %421 = vmatpush2.bf16.msra.mxu0 %v334
    %422 = vmatprep.mubr.bf16.mxu0 %v131
    %423 = vmatmul.mubr.bf16.gmra.mxu0 %v130
    %v424 = vpop.f32.mrf.mxu0
    %v425 = vadd.f32 0.0, %v424
    %v426 = vpop.f32.mrf.mxu0
    %v427 = vpop.f32.mrf.mxu0
    %v428 = vpop.f32.mrf.mxu0
    %429 = vdwg.mxu0
    %430 = vmatprep.subr.bf16.mxu0 0
    %431 = vmatpush1.bf16.msra.mxu0 %v349
    %432 = vmatprep.subr.bf16.mxu0 0
    %433 = vmatpush1.bf16.msra.mxu0 %v348
    %434 = vmatprep.subr.bf16.mxu0 0
    %435 = vmatpush1.bf16.msra.mxu0 %v347
    %436 = vmatprep.subr.bf16.mxu0 0
    %437 = vmatpush1.bf16.msra.mxu0 %v346
    %438 = vmatprep.subr.bf16.mxu0 0
    %439 = vmatpush1.bf16.msra.mxu0 %v345
    %440 = vmatprep.subr.bf16.mxu0 0
    %441 = vmatpush1.bf16.msra.mxu0 %v344
    %442 = vmatprep.subr.bf16.mxu0 0
    %443 = vmatpush1.bf16.msra.mxu0 %v343
    %444 = vmatprep.subr.bf16.mxu0 0
    %445 = vmatpush1.bf16.msra.mxu0 %v342
    %446 = vmatprep.subr.bf16.mxu0 0
    %447 = vmatpush2.bf16.msra.mxu0 %v357
    %448 = vmatprep.subr.bf16.mxu0 0
    %449 = vmatpush2.bf16.msra.mxu0 %v356
    %450 = vmatprep.subr.bf16.mxu0 0
    %451 = vmatpush2.bf16.msra.mxu0 %v355
    %452 = vmatprep.subr.bf16.mxu0 0
    %453 = vmatpush2.bf16.msra.mxu0 %v354
    %454 = vmatprep.subr.bf16.mxu0 0
    %455 = vmatpush2.bf16.msra.mxu0 %v353
    %456 = vmatprep.subr.bf16.mxu0 0
    %457 = vmatpush2.bf16.msra.mxu0 %v352
    %458 = vmatprep.subr.bf16.mxu0 0
    %459 = vmatpush2.bf16.msra.mxu0 %v351
    %460 = vmatprep.subr.bf16.mxu0 0
    %461 = vmatpush2.bf16.msra.mxu0 %v350
    %462 = vmatprep.mubr.bf16.mxu0 %v133
    %463 = vmatmul.mubr.bf16.gmra.mxu0 %v132
    %v464 = vpop.f32.mrf.mxu0
    %v465 = vadd.f32 %v425, %v464
    %v466 = vpop.f32.mrf.mxu0
    %v467 = vpop.f32.mrf.mxu0
    %v468 = vpop.f32.mrf.mxu0
    %469 = vdwg.mxu0
    %v470 = vld [vmem:[#allocation2 + $0x100] sm:$0xf]
    %v471 = vld [vmem:[#allocation2 + $0x104] sm:$0xf]
    %v472 = vld [vmem:[#allocation2 + $0x108] sm:$0xf]
    %v473 = vld [vmem:[#allocation2 + $0x10c] sm:$0xf]
    %v474 = vld [vmem:[#allocation2 + $0x110] sm:$0xf]
    %v475 = vld [vmem:[#allocation2 + $0x114] sm:$0xf]
    %v476 = vld [vmem:[#allocation2 + $0x118] sm:$0xf]
    %v477 = vld [vmem:[#allocation2 + $0x11c] sm:$0xf]
    %v478 = vld [vmem:[#allocation2 + $0x120] sm:$0xf]
    %v479 = vld [vmem:[#allocation2 + $0x124] sm:$0xf]
    %v480 = vld [vmem:[#allocation2 + $0x128] sm:$0xf]
    %v481 = vld [vmem:[#allocation2 + $0x12c] sm:$0xf]
    %v482 = vld [vmem:[#allocation2 + $0x130] sm:$0xf]
    %v483 = vld [vmem:[#allocation2 + $0x134] sm:$0xf]
    %v484 = vld [vmem:[#allocation2 + $0x138] sm:$0xf]
    %v485 = vld [vmem:[#allocation2 + $0x13c] sm:$0xf]
    %v486 = vld [vmem:[#allocation2 + $0x140] sm:$0xf]
    %v487 = vld [vmem:[#allocation2 + $0x144] sm:$0xf]
    %v488 = vld [vmem:[#allocation2 + $0x148] sm:$0xf]
    %v489 = vld [vmem:[#allocation2 + $0x14c] sm:$0xf]
    %v490 = vld [vmem:[#allocation2 + $0x150] sm:$0xf]
    %v491 = vld [vmem:[#allocation2 + $0x154] sm:$0xf]
    %v492 = vld [vmem:[#allocation2 + $0x158] sm:$0xf]
    %v493 = vld [vmem:[#allocation2 + $0x15c] sm:$0xf]
    %v494 = vld [vmem:[#allocation2 + $0x160] sm:$0xf]
    %v495 = vld [vmem:[#allocation2 + $0x164] sm:$0xf]
    %v496 = vld [vmem:[#allocation2 + $0x168] sm:$0xf]
    %v497 = vld [vmem:[#allocation2 + $0x16c] sm:$0xf]
    %v498 = vld [vmem:[#allocation2 + $0x170] sm:$0xf]
    %v499 = vld [vmem:[#allocation2 + $0x174] sm:$0xf]
    %v500 = vld [vmem:[#allocation2 + $0x178] sm:$0xf]
    %v501 = vld [vmem:[#allocation2 + $0x17c] sm:$0xf]
    %v502 = vld [vmem:[#allocation2 + $0x180] sm:$0xf]
    %v503 = vld [vmem:[#allocation2 + $0x184] sm:$0xf]
    %v504 = vld [vmem:[#allocation2 + $0x188] sm:$0xf]
    %v505 = vld [vmem:[#allocation2 + $0x18c] sm:$0xf]
    %v506 = vld [vmem:[#allocation2 + $0x190] sm:$0xf]
    %v507 = vld [vmem:[#allocation2 + $0x194] sm:$0xf]
    %v508 = vld [vmem:[#allocation2 + $0x198] sm:$0xf]
    %v509 = vld [vmem:[#allocation2 + $0x19c] sm:$0xf]
    %v510 = vld [vmem:[#allocation2 + $0x1a0] sm:$0xf]
    %v511 = vld [vmem:[#allocation2 + $0x1a4] sm:$0xf]
    %v512 = vld [vmem:[#allocation2 + $0x1a8] sm:$0xf]
    %v513 = vld [vmem:[#allocation2 + $0x1ac] sm:$0xf]
    %v514 = vld [vmem:[#allocation2 + $0x1b0] sm:$0xf]
    %v515 = vld [vmem:[#allocation2 + $0x1b4] sm:$0xf]
    %v516 = vld [vmem:[#allocation2 + $0x1b8] sm:$0xf]
    %v517 = vld [vmem:[#allocation2 + $0x1bc] sm:$0xf]
    %v518 = vld [vmem:[#allocation2 + $0x1c0] sm:$0xf]
    %v519 = vld [vmem:[#allocation2 + $0x1c4] sm:$0xf]
    %v520 = vld [vmem:[#allocation2 + $0x1c8] sm:$0xf]
    %v521 = vld [vmem:[#allocation2 + $0x1cc] sm:$0xf]
    %v522 = vld [vmem:[#allocation2 + $0x1d0] sm:$0xf]
    %v523 = vld [vmem:[#allocation2 + $0x1d4] sm:$0xf]
    %v524 = vld [vmem:[#allocation2 + $0x1d8] sm:$0xf]
    %v525 = vld [vmem:[#allocation2 + $0x1dc] sm:$0xf]
    %v526 = vld [vmem:[#allocation2 + $0x1e0] sm:$0xf]
    %v527 = vld [vmem:[#allocation2 + $0x1e4] sm:$0xf]
    %v528 = vld [vmem:[#allocation2 + $0x1e8] sm:$0xf]
    %v529 = vld [vmem:[#allocation2 + $0x1ec] sm:$0xf]
    %v530 = vld [vmem:[#allocation2 + $0x1f0] sm:$0xf]
    %v531 = vld [vmem:[#allocation2 + $0x1f4] sm:$0xf]
    %v532 = vld [vmem:[#allocation2 + $0x1f8] sm:$0xf]
    %v533 = vld [vmem:[#allocation2 + $0x1fc] sm:$0xf]
    %v598 = vunpack.c.l.b16 %v470
    %v599 = vunpack.c.l.b16 %v471
    %v600 = vunpack.c.l.b16 %v472
    %v601 = vunpack.c.l.b16 %v473
    %v602 = vunpack.c.l.b16 %v474
    %v603 = vunpack.c.l.b16 %v475
    %v604 = vunpack.c.l.b16 %v476
    %v605 = vunpack.c.l.b16 %v477
    %v606 = vunpack.c.l.b16 %v478
    %v607 = vunpack.c.l.b16 %v479
    %v608 = vunpack.c.l.b16 %v480
    %v609 = vunpack.c.l.b16 %v481
    %v610 = vunpack.c.l.b16 %v482
    %v611 = vunpack.c.l.b16 %v483
    %v612 = vunpack.c.l.b16 %v484
    %v613 = vunpack.c.l.b16 %v485
    %v614 = vunpack.c.l.b16 %v486
    %v615 = vunpack.c.l.b16 %v487
    %v616 = vunpack.c.l.b16 %v488
    %v617 = vunpack.c.l.b16 %v489
    %v618 = vunpack.c.l.b16 %v490
    %v619 = vunpack.c.l.b16 %v491
    %v620 = vunpack.c.l.b16 %v492
    %v621 = vunpack.c.l.b16 %v493
    %v622 = vunpack.c.l.b16 %v494
    %v623 = vunpack.c.l.b16 %v495
    %v624 = vunpack.c.l.b16 %v496
    %v625 = vunpack.c.l.b16 %v497
    %v626 = vunpack.c.l.b16 %v498
    %v627 = vunpack.c.l.b16 %v499
    %v628 = vunpack.c.l.b16 %v500
    %v629 = vunpack.c.l.b16 %v501
    %v630 = vunpack.c.l.b16 %v502
    %v631 = vunpack.c.l.b16 %v503
    %v632 = vunpack.c.l.b16 %v504
    %v633 = vunpack.c.l.b16 %v505
    %v634 = vunpack.c.l.b16 %v506
    %v635 = vunpack.c.l.b16 %v507
    %v636 = vunpack.c.l.b16 %v508
    %v637 = vunpack.c.l.b16 %v509
    %v638 = vunpack.c.l.b16 %v510
    %v639 = vunpack.c.l.b16 %v511
    %v640 = vunpack.c.l.b16 %v512
    %v641 = vunpack.c.l.b16 %v513
    %v642 = vunpack.c.l.b16 %v514
    %v643 = vunpack.c.l.b16 %v515
    %v644 = vunpack.c.l.b16 %v516
    %v645 = vunpack.c.l.b16 %v517
    %v646 = vunpack.c.l.b16 %v518
    %v647 = vunpack.c.l.b16 %v519
    %v648 = vunpack.c.l.b16 %v520
    %v649 = vunpack.c.l.b16 %v521
    %v650 = vunpack.c.l.b16 %v522
    %v651 = vunpack.c.l.b16 %v523
    %v652 = vunpack.c.l.b16 %v524
    %v653 = vunpack.c.l.b16 %v525
    %v654 = vunpack.c.l.b16 %v526
    %v655 = vunpack.c.l.b16 %v527
    %v656 = vunpack.c.l.b16 %v528
    %v657 = vunpack.c.l.b16 %v529
    %v658 = vunpack.c.l.b16 %v530
    %v659 = vunpack.c.l.b16 %v531
    %v660 = vunpack.c.l.b16 %v532
    %v661 = vunpack.c.l.b16 %v533
    %v662 = vpack.c.b16 %v599, %v598
    %v663 = vpack.c.b16 %v601, %v600
    %v664 = vpack.c.b16 %v603, %v602
    %v665 = vpack.c.b16 %v605, %v604
    %v666 = vpack.c.b16 %v607, %v606
    %v667 = vpack.c.b16 %v609, %v608
    %v668 = vpack.c.b16 %v611, %v610
    %v669 = vpack.c.b16 %v613, %v612
    %v670 = vpack.c.b16 %v615, %v614
    %v671 = vpack.c.b16 %v617, %v616
    %v672 = vpack.c.b16 %v619, %v618
    %v673 = vpack.c.b16 %v621, %v620
    %v674 = vpack.c.b16 %v623, %v622
    %v675 = vpack.c.b16 %v625, %v624
    %v676 = vpack.c.b16 %v627, %v626
    %v677 = vpack.c.b16 %v629, %v628
    %v678 = vpack.c.b16 %v631, %v630
    %v679 = vpack.c.b16 %v633, %v632
    %v680 = vpack.c.b16 %v635, %v634
    %v681 = vpack.c.b16 %v637, %v636
    %v682 = vpack.c.b16 %v639, %v638
    %v683 = vpack.c.b16 %v641, %v640
    %v684 = vpack.c.b16 %v643, %v642
    %v685 = vpack.c.b16 %v645, %v644
    %v686 = vpack.c.b16 %v647, %v646
    %v687 = vpack.c.b16 %v649, %v648
    %v688 = vpack.c.b16 %v651, %v650
    %v689 = vpack.c.b16 %v653, %v652
    %v690 = vpack.c.b16 %v655, %v654
    %v691 = vpack.c.b16 %v657, %v656
    %v692 = vpack.c.b16 %v659, %v658
    %v693 = vpack.c.b16 %v661, %v660
    %726 = vmatprep.subr.bf16.mxu0 0
    %727 = vmatpush1.bf16.msra.mxu0 %v669
    %728 = vmatprep.subr.bf16.mxu0 0
    %729 = vmatpush1.bf16.msra.mxu0 %v668
    %730 = vmatprep.subr.bf16.mxu0 0
    %731 = vmatpush1.bf16.msra.mxu0 %v667
    %732 = vmatprep.subr.bf16.mxu0 0
    %733 = vmatpush1.bf16.msra.mxu0 %v666
    %734 = vmatprep.subr.bf16.mxu0 0
    %735 = vmatpush1.bf16.msra.mxu0 %v665
    %736 = vmatprep.subr.bf16.mxu0 0
    %737 = vmatpush1.bf16.msra.mxu0 %v664
    %738 = vmatprep.subr.bf16.mxu0 0
    %739 = vmatpush1.bf16.msra.mxu0 %v663
    %740 = vmatprep.subr.bf16.mxu0 0
    %741 = vmatpush1.bf16.msra.mxu0 %v662
    %742 = vmatprep.subr.bf16.mxu0 0
    %743 = vmatpush2.bf16.msra.mxu0 %v677
    %744 = vmatprep.subr.bf16.mxu0 0
    %745 = vmatpush2.bf16.msra.mxu0 %v676
    %746 = vmatprep.subr.bf16.mxu0 0
    %747 = vmatpush2.bf16.msra.mxu0 %v675
    %748 = vmatprep.subr.bf16.mxu0 0
    %749 = vmatpush2.bf16.msra.mxu0 %v674
    %750 = vmatprep.subr.bf16.mxu0 0
    %751 = vmatpush2.bf16.msra.mxu0 %v673
    %752 = vmatprep.subr.bf16.mxu0 0
    %753 = vmatpush2.bf16.msra.mxu0 %v672
    %754 = vmatprep.subr.bf16.mxu0 0
    %755 = vmatpush2.bf16.msra.mxu0 %v671
    %756 = vmatprep.subr.bf16.mxu0 0
    %757 = vmatpush2.bf16.msra.mxu0 %v670
    %758 = vmatprep.mubr.bf16.mxu0 %v131
    %759 = vmatmul.mubr.bf16.gmra.mxu0 %v130
    %v760 = vpop.f32.mrf.mxu0
    %v761 = vadd.f32 0.0, %v760
    %v762 = vpop.f32.mrf.mxu0
    %v763 = vpop.f32.mrf.mxu0
    %v764 = vpop.f32.mrf.mxu0
    %765 = vdwg.mxu0
    %766 = vmatprep.subr.bf16.mxu0 0
    %767 = vmatpush1.bf16.msra.mxu0 %v685
    %768 = vmatprep.subr.bf16.mxu0 0
    %769 = vmatpush1.bf16.msra.mxu0 %v684
    %770 = vmatprep.subr.bf16.mxu0 0
    %771 = vmatpush1.bf16.msra.mxu0 %v683
    %772 = vmatprep.subr.bf16.mxu0 0
    %773 = vmatpush1.bf16.msra.mxu0 %v682
    %774 = vmatprep.subr.bf16.mxu0 0
    %775 = vmatpush1.bf16.msra.mxu0 %v681
    %776 = vmatprep.subr.bf16.mxu0 0
    %777 = vmatpush1.bf16.msra.mxu0 %v680
    %778 = vmatprep.subr.bf16.mxu0 0
    %779 = vmatpush1.bf16.msra.mxu0 %v679
    %780 = vmatprep.subr.bf16.mxu0 0
    %781 = vmatpush1.bf16.msra.mxu0 %v678
    %782 = vmatprep.subr.bf16.mxu0 0
    %783 = vmatpush2.bf16.msra.mxu0 %v693
    %784 = vmatprep.subr.bf16.mxu0 0
    %785 = vmatpush2.bf16.msra.mxu0 %v692
    %786 = vmatprep.subr.bf16.mxu0 0
    %787 = vmatpush2.bf16.msra.mxu0 %v691
    %788 = vmatprep.subr.bf16.mxu0 0
    %789 = vmatpush2.bf16.msra.mxu0 %v690
    %790 = vmatprep.subr.bf16.mxu0 0
    %791 = vmatpush2.bf16.msra.mxu0 %v689
    %792 = vmatprep.subr.bf16.mxu0 0
    %793 = vmatpush2.bf16.msra.mxu0 %v688
    %794 = vmatprep.subr.bf16.mxu0 0
    %795 = vmatpush2.bf16.msra.mxu0 %v687
    %796 = vmatprep.subr.bf16.mxu0 0
    %797 = vmatpush2.bf16.msra.mxu0 %v686
    %798 = vmatprep.mubr.bf16.mxu0 %v133
    %799 = vmatmul.mubr.bf16.gmra.mxu0 %v132
    %v800 = vpop.f32.mrf.mxu0
    %v801 = vadd.f32 %v761, %v800
    %v802 = vpop.f32.mrf.mxu0
    %v803 = vpop.f32.mrf.mxu0
    %v804 = vpop.f32.mrf.mxu0
    %805 = vdwg.mxu0
    %v806 = vlaneseq
    %v807 = vshrl.u32 %v806, 7
    %v808 = vsub.s32 1, %v807
    %v809 = vrot.slane %v45, %v808
    %v810 = vlaneseq
    %v811 = vshrl.u32 %v810, 7
    %v812 = vsub.s32 1, %v811
    %v813 = vrot.slane %v46, %v812
    %v814 = vadd.f32 %v465, %v809
    %v815 = vadd.f32 %v801, %v813
    %v816 = vmax.f32 %v814, 0.0
    %v817 = vmax.f32 %v815, 0.0
    %v818 = vpack.c.bf16 %v816, %v816
    %v819 = vpack.c.bf16 %v817, %v817
    %v820 = vld [vmem:[#allocation2 + $0x200] sm:$0xf]
    %v821 = vld [vmem:[#allocation2 + $0x204] sm:$0xf]
    %v822 = vld [vmem:[#allocation2 + $0x208] sm:$0xf]
    %v823 = vld [vmem:[#allocation2 + $0x20c] sm:$0xf]
    %v824 = vld [vmem:[#allocation2 + $0x210] sm:$0xf]
    %v825 = vld [vmem:[#allocation2 + $0x214] sm:$0xf]
    %v826 = vld [vmem:[#allocation2 + $0x218] sm:$0xf]
    %v827 = vld [vmem:[#allocation2 + $0x21c] sm:$0xf]
    %v828 = vld [vmem:[#allocation2 + $0x220] sm:$0xf]
    %v829 = vld [vmem:[#allocation2 + $0x224] sm:$0xf]
    %v830 = vld [vmem:[#allocation2 + $0x228] sm:$0xf]
    %v831 = vld [vmem:[#allocation2 + $0x22c] sm:$0xf]
    %v832 = vld [vmem:[#allocation2 + $0x230] sm:$0xf]
    %v833 = vld [vmem:[#allocation2 + $0x234] sm:$0xf]
    %v834 = vld [vmem:[#allocation2 + $0x238] sm:$0xf]
    %v835 = vld [vmem:[#allocation2 + $0x23c] sm:$0xf]
    %v836 = vld [vmem:[#allocation2 + $0x240] sm:$0xf]
    %v837 = vld [vmem:[#allocation2 + $0x244] sm:$0xf]
    %v838 = vld [vmem:[#allocation2 + $0x248] sm:$0xf]
    %v839 = vld [vmem:[#allocation2 + $0x24c] sm:$0xf]
    %v840 = vld [vmem:[#allocation2 + $0x250] sm:$0xf]
    %v841 = vld [vmem:[#allocation2 + $0x254] sm:$0xf]
    %v842 = vld [vmem:[#allocation2 + $0x258] sm:$0xf]
    %v843 = vld [vmem:[#allocation2 + $0x25c] sm:$0xf]
    %v844 = vld [vmem:[#allocation2 + $0x260] sm:$0xf]
    %v845 = vld [vmem:[#allocation2 + $0x264] sm:$0xf]
    %v846 = vld [vmem:[#allocation2 + $0x268] sm:$0xf]
    %v847 = vld [vmem:[#allocation2 + $0x26c] sm:$0xf]
    %v848 = vld [vmem:[#allocation2 + $0x270] sm:$0xf]
    %v849 = vld [vmem:[#allocation2 + $0x274] sm:$0xf]
    %v850 = vld [vmem:[#allocation2 + $0x278] sm:$0xf]
    %v851 = vld [vmem:[#allocation2 + $0x27c] sm:$0xf]
    %v852 = vlaneseq
    %v853 = vshrl.u32 %v852, 7
    %v854 = vsub.s32 2, %v853
    %v855 = vrot.slane %v45, %v854
    %v888 = vunpack.c.l.b16 %v820
    %v889 = vunpack.c.l.b16 %v821
    %v890 = vunpack.c.l.b16 %v822
    %v891 = vunpack.c.l.b16 %v823
    %v892 = vunpack.c.l.b16 %v824
    %v893 = vunpack.c.l.b16 %v825
    %v894 = vunpack.c.l.b16 %v826
    %v895 = vunpack.c.l.b16 %v827
    %v896 = vunpack.c.l.b16 %v828
    %v897 = vunpack.c.l.b16 %v829
    %v898 = vunpack.c.l.b16 %v830
    %v899 = vunpack.c.l.b16 %v831
    %v900 = vunpack.c.l.b16 %v832
    %v901 = vunpack.c.l.b16 %v833
    %v902 = vunpack.c.l.b16 %v834
    %v903 = vunpack.c.l.b16 %v835
    %v904 = vunpack.c.l.b16 %v836
    %v905 = vunpack.c.l.b16 %v837
    %v906 = vunpack.c.l.b16 %v838
    %v907 = vunpack.c.l.b16 %v839
    %v908 = vunpack.c.l.b16 %v840
    %v909 = vunpack.c.l.b16 %v841
    %v910 = vunpack.c.l.b16 %v842
    %v911 = vunpack.c.l.b16 %v843
    %v912 = vunpack.c.l.b16 %v844
    %v913 = vunpack.c.l.b16 %v845
    %v914 = vunpack.c.l.b16 %v846
    %v915 = vunpack.c.l.b16 %v847
    %v916 = vunpack.c.l.b16 %v848
    %v917 = vunpack.c.l.b16 %v849
    %v918 = vunpack.c.l.b16 %v850
    %v919 = vunpack.c.l.b16 %v851
    %v920 = vpack.c.b16 %v889, %v888
    %v921 = vpack.c.b16 %v891, %v890
    %v922 = vpack.c.b16 %v893, %v892
    %v923 = vpack.c.b16 %v895, %v894
    %v924 = vpack.c.b16 %v897, %v896
    %v925 = vpack.c.b16 %v899, %v898
    %v926 = vpack.c.b16 %v901, %v900
    %v927 = vpack.c.b16 %v903, %v902
    %v928 = vpack.c.b16 %v905, %v904
    %v929 = vpack.c.b16 %v907, %v906
    %v930 = vpack.c.b16 %v909, %v908
    %v931 = vpack.c.b16 %v911, %v910
    %v932 = vpack.c.b16 %v913, %v912
    %v933 = vpack.c.b16 %v915, %v914
    %v934 = vpack.c.b16 %v917, %v916
    %v935 = vpack.c.b16 %v919, %v918
    %952 = vmatprep.subr.bf16.mxu0 0
    %953 = vmatpush1.bf16.msra.mxu0 %v927
    %954 = vmatprep.subr.bf16.mxu0 0
    %955 = vmatpush1.bf16.msra.mxu0 %v926
    %956 = vmatprep.subr.bf16.mxu0 0
    %957 = vmatpush1.bf16.msra.mxu0 %v925
    %958 = vmatprep.subr.bf16.mxu0 0
    %959 = vmatpush1.bf16.msra.mxu0 %v924
    %960 = vmatprep.subr.bf16.mxu0 0
    %961 = vmatpush1.bf16.msra.mxu0 %v923
    %962 = vmatprep.subr.bf16.mxu0 0
    %963 = vmatpush1.bf16.msra.mxu0 %v922
    %964 = vmatprep.subr.bf16.mxu0 0
    %965 = vmatpush1.bf16.msra.mxu0 %v921
    %966 = vmatprep.subr.bf16.mxu0 0
    %967 = vmatpush1.bf16.msra.mxu0 %v920
    %968 = vmatprep.subr.bf16.mxu0 0
    %969 = vmatpush2.bf16.msra.mxu0 %v935
    %970 = vmatprep.subr.bf16.mxu0 0
    %971 = vmatpush2.bf16.msra.mxu0 %v934
    %972 = vmatprep.subr.bf16.mxu0 0
    %973 = vmatpush2.bf16.msra.mxu0 %v933
    %974 = vmatprep.subr.bf16.mxu0 0
    %975 = vmatpush2.bf16.msra.mxu0 %v932
    %976 = vmatprep.subr.bf16.mxu0 0
    %977 = vmatpush2.bf16.msra.mxu0 %v931
    %978 = vmatprep.subr.bf16.mxu0 0
    %979 = vmatpush2.bf16.msra.mxu0 %v930
    %980 = vmatprep.subr.bf16.mxu0 0
    %981 = vmatpush2.bf16.msra.mxu0 %v929
    %982 = vmatprep.subr.bf16.mxu0 0
    %983 = vmatpush2.bf16.msra.mxu0 %v928
    %984 = vmatprep.mubr.bf16.mxu0 %v819
    %985 = vmatmul.mubr.bf16.gmra.mxu0 %v818
    %v986 = vpop.f32.mrf.mxu0
    %v987 = vadd.f32 %v855, %v986
    %v988 = vpop.f32.mrf.mxu0
    %v989 = vpop.f32.mrf.mxu0
    %v990 = vpop.f32.mrf.mxu0
    %991 = vdwg.mxu0
    %v992 = vmax.f32 %v987, 0.0
    %v993 = vpack.c.bf16 %v992, %v992
    %v994 = vld [vmem:[#allocation2 + $0x280] sm:$0xf]
    %v995 = vld [vmem:[#allocation2 + $0x284] sm:$0xf]
    %v996 = vld [vmem:[#allocation2 + $0x288] sm:$0xf]
    %v997 = vld [vmem:[#allocation2 + $0x28c] sm:$0xf]
    %v998 = vld [vmem:[#allocation2 + $0x290] sm:$0xf]
    %v999 = vld [vmem:[#allocation2 + $0x294] sm:$0xf]
    %v1000 = vld [vmem:[#allocation2 + $0x298] sm:$0xf]
    %v1001 = vld [vmem:[#allocation2 + $0x29c] sm:$0xf]
    %v1002 = vld [vmem:[#allocation2 + $0x2a0] sm:$0xf]
    %v1003 = vld [vmem:[#allocation2 + $0x2a4] sm:$0xf]
    %v1004 = vld [vmem:[#allocation2 + $0x2a8] sm:$0xf]
    %v1005 = vld [vmem:[#allocation2 + $0x2ac] sm:$0xf]
    %v1006 = vld [vmem:[#allocation2 + $0x2b0] sm:$0xf]
    %v1007 = vld [vmem:[#allocation2 + $0x2b4] sm:$0xf]
    %v1008 = vld [vmem:[#allocation2 + $0x2b8] sm:$0xf]
    %v1009 = vld [vmem:[#allocation2 + $0x2bc] sm:$0xf]
    %v1010 = vlaneseq
    %v1011 = vshrl.u32 %v1010, 7
    %v1012 = vsub.s32 3, %v1011
    %v1013 = vrot.slane %v45, %v1012
    %v1030 = vunpack.c.l.b16 %v994
    %v1031 = vunpack.c.l.b16 %v995
    %v1032 = vunpack.c.l.b16 %v996
    %v1033 = vunpack.c.l.b16 %v997
    %v1034 = vunpack.c.l.b16 %v998
    %v1035 = vunpack.c.l.b16 %v999
    %v1036 = vunpack.c.l.b16 %v1000
    %v1037 = vunpack.c.l.b16 %v1001
    %v1038 = vunpack.c.l.b16 %v1002
    %v1039 = vunpack.c.l.b16 %v1003
    %v1040 = vunpack.c.l.b16 %v1004
    %v1041 = vunpack.c.l.b16 %v1005
    %v1042 = vunpack.c.l.b16 %v1006
    %v1043 = vunpack.c.l.b16 %v1007
    %v1044 = vunpack.c.l.b16 %v1008
    %v1045 = vunpack.c.l.b16 %v1009
    %v1046 = vpack.c.b16 %v1031, %v1030
    %v1047 = vpack.c.b16 %v1033, %v1032
    %v1048 = vpack.c.b16 %v1035, %v1034
    %v1049 = vpack.c.b16 %v1037, %v1036
    %v1050 = vpack.c.b16 %v1039, %v1038
    %v1051 = vpack.c.b16 %v1041, %v1040
    %v1052 = vpack.c.b16 %v1043, %v1042
    %v1053 = vpack.c.b16 %v1045, %v1044
    %1062 = vmatprep.subr.bf16.mxu0 0
    %1063 = vmatpush1.bf16.msra.mxu0 %v1053
    %1064 = vmatprep.subr.bf16.mxu0 0
    %1065 = vmatpush1.bf16.msra.mxu0 %v1052
    %1066 = vmatprep.subr.bf16.mxu0 0
    %1067 = vmatpush1.bf16.msra.mxu0 %v1051
    %1068 = vmatprep.subr.bf16.mxu0 0
    %1069 = vmatpush1.bf16.msra.mxu0 %v1050
    %1070 = vmatprep.subr.bf16.mxu0 0
    %1071 = vmatpush1.bf16.msra.mxu0 %v1049
    %1072 = vmatprep.subr.bf16.mxu0 0
    %1073 = vmatpush1.bf16.msra.mxu0 %v1048
    %1074 = vmatprep.subr.bf16.mxu0 0
    %1075 = vmatpush1.bf16.msra.mxu0 %v1047
    %1076 = vmatprep.subr.bf16.mxu0 0
    %1077 = vmatpush1.bf16.msra.mxu0 %v1046
    %1078 = vmatprep.subr.bf16.mxu0 0
    %1079 = vmatpush2.bf16.msra.mxu0 0
    %1080 = vmatprep.subr.bf16.mxu0 0
    %1081 = vmatpush2.bf16.msra.mxu0 0
    %1082 = vmatprep.subr.bf16.mxu0 0
    %1083 = vmatpush2.bf16.msra.mxu0 0
    %1084 = vmatprep.subr.bf16.mxu0 0
    %1085 = vmatpush2.bf16.msra.mxu0 0
    %1086 = vmatprep.subr.bf16.mxu0 0
    %1087 = vmatpush2.bf16.msra.mxu0 0
    %1088 = vmatprep.subr.bf16.mxu0 0
    %1089 = vmatpush2.bf16.msra.mxu0 0
    %1090 = vmatprep.subr.bf16.mxu0 0
    %1091 = vmatpush2.bf16.msra.mxu0 0
    %1092 = vmatprep.subr.bf16.mxu0 0
    %1093 = vmatpush2.bf16.msra.mxu0 0
    %1094 = vmatprep.mubr.bf16.mxu0 0
    %1095 = vmatmul.mubr.bf16.gmra.mxu0 %v993
    %v1096 = vpop.f32.mrf.mxu0
    %v1097 = vadd.f32 %v1013, %v1096
    %v1098 = vpop.f32.mrf.mxu0
    %v1099 = vpop.f32.mrf.mxu0
    %v1100 = vpop.f32.mrf.mxu0
    %1101 = vdwg.mxu0
    %v1102 = vmax.f32 %v1097, 0.0
    %v1103 = vpack.c.bf16 %v1102, %v1102
    %v1104 = vld [vmem:[#allocation2 + $0x2c0] sm:$0xf]
    %v1105 = vld [vmem:[#allocation2 + $0x2c4] sm:$0xf]
    %v1106 = vld [vmem:[#allocation2 + $0x2c8] sm:$0xf]
    %v1107 = vld [vmem:[#allocation2 + $0x2cc] sm:$0xf]
    %v1108 = vld [vmem:[#allocation2 + $0x2d0] sm:$0xf]
    %v1109 = vld [vmem:[#allocation2 + $0x2d4] sm:$0xf]
    %v1110 = vld [vmem:[#allocation2 + $0x2d8] sm:$0xf]
    %v1111 = vld [vmem:[#allocation2 + $0x2dc] sm:$0xf]
    %v1112 = vld [vmem:[#allocation2 + $0x2e0] sm:$0xf]
    %v1113 = vld [vmem:[#allocation2 + $0x2e4] sm:$0xf]
    %v1114 = vld [vmem:[#allocation2 + $0x2e8] sm:$0xf]
    %v1115 = vld [vmem:[#allocation2 + $0x2ec] sm:$0xf]
    %v1116 = vld [vmem:[#allocation2 + $0x2f0] sm:$0xf]
    %v1117 = vld [vmem:[#allocation2 + $0x2f4] sm:$0xf]
    %v1118 = vld [vmem:[#allocation2 + $0x2f8] sm:$0xf]
    %v1119 = vld [vmem:[#allocation2 + $0x2fc] sm:$0xf]
    %v1120 = vlaneseq
    %v1121 = vshrl.u32 %v1120, 7
    %v1122 = vsub.s32 4, %v1121
    %v1123 = vrot.slane %v45, %v1122
    %v1140 = vunpack.c.l.b16 %v1104
    %v1141 = vunpack.c.l.b16 %v1105
    %v1142 = vunpack.c.l.b16 %v1106
    %v1143 = vunpack.c.l.b16 %v1107
    %v1144 = vunpack.c.l.b16 %v1108
    %v1145 = vunpack.c.l.b16 %v1109
    %v1146 = vunpack.c.l.b16 %v1110
    %v1147 = vunpack.c.l.b16 %v1111
    %v1148 = vunpack.c.l.b16 %v1112
    %v1149 = vunpack.c.l.b16 %v1113
    %v1150 = vunpack.c.l.b16 %v1114
    %v1151 = vunpack.c.l.b16 %v1115
    %v1152 = vunpack.c.l.b16 %v1116
    %v1153 = vunpack.c.l.b16 %v1117
    %v1154 = vunpack.c.l.b16 %v1118
    %v1155 = vunpack.c.l.b16 %v1119
    %v1156 = vpack.c.b16 %v1141, %v1140
    %v1157 = vpack.c.b16 %v1143, %v1142
    %v1158 = vpack.c.b16 %v1145, %v1144
    %v1159 = vpack.c.b16 %v1147, %v1146
    %v1160 = vpack.c.b16 %v1149, %v1148
    %v1161 = vpack.c.b16 %v1151, %v1150
    %v1162 = vpack.c.b16 %v1153, %v1152
    %v1163 = vpack.c.b16 %v1155, %v1154
    %1172 = vmatprep.subr.bf16.mxu0 0
    %1173 = vmatpush1.bf16.msra.mxu0 %v1163
    %1174 = vmatprep.subr.bf16.mxu0 0
    %1175 = vmatpush1.bf16.msra.mxu0 %v1162
    %1176 = vmatprep.subr.bf16.mxu0 0
    %1177 = vmatpush1.bf16.msra.mxu0 %v1161
    %1178 = vmatprep.subr.bf16.mxu0 0
    %1179 = vmatpush1.bf16.msra.mxu0 %v1160
    %1180 = vmatprep.subr.bf16.mxu0 0
    %1181 = vmatpush1.bf16.msra.mxu0 %v1159
    %1182 = vmatprep.subr.bf16.mxu0 0
    %1183 = vmatpush1.bf16.msra.mxu0 %v1158
    %1184 = vmatprep.subr.bf16.mxu0 0
    %1185 = vmatpush1.bf16.msra.mxu0 %v1157
    %1186 = vmatprep.subr.bf16.mxu0 0
    %1187 = vmatpush1.bf16.msra.mxu0 %v1156
    %1188 = vmatprep.subr.bf16.mxu0 0
    %1189 = vmatpush2.bf16.msra.mxu0 0
    %1190 = vmatprep.subr.bf16.mxu0 0
    %1191 = vmatpush2.bf16.msra.mxu0 0
    %1192 = vmatprep.subr.bf16.mxu0 0
    %1193 = vmatpush2.bf16.msra.mxu0 0
    %1194 = vmatprep.subr.bf16.mxu0 0
    %1195 = vmatpush2.bf16.msra.mxu0 0
    %1196 = vmatprep.subr.bf16.mxu0 0
    %1197 = vmatpush2.bf16.msra.mxu0 0
    %1198 = vmatprep.subr.bf16.mxu0 0
    %1199 = vmatpush2.bf16.msra.mxu0 0
    %1200 = vmatprep.subr.bf16.mxu0 0
    %1201 = vmatpush2.bf16.msra.mxu0 0
    %1202 = vmatprep.subr.bf16.mxu0 0
    %1203 = vmatpush2.bf16.msra.mxu0 0
    %1204 = vmatprep.mubr.bf16.mxu0 0
    %1205 = vmatmul.mubr.bf16.gmra.mxu0 %v1103
    %v1206 = vpop.f32.mrf.mxu0
    %v1207 = vadd.f32 %v1123, %v1206
    %v1208 = vpop.f32.mrf.mxu0
    %v1209 = vpop.f32.mrf.mxu0
    %v1210 = vpop.f32.mrf.mxu0
    %1211 = vdwg.mxu0
    %v1212 = vmax.f32 %v1207, 0.0
    %v1213 = vpack.c.bf16 %v1212, %v1212
    %v1214 = vld [vmem:[#allocation2 + $0x300] sm:$0xf]
    %v1215 = vld [vmem:[#allocation2 + $0x304] sm:$0xf]
    %v1216 = vld [vmem:[#allocation2 + $0x308] sm:$0xf]
    %v1217 = vld [vmem:[#allocation2 + $0x30c] sm:$0xf]
    %v1218 = vld [vmem:[#allocation2 + $0x310] sm:$0xf]
    %v1219 = vld [vmem:[#allocation2 + $0x314] sm:$0xf]
    %v1220 = vld [vmem:[#allocation2 + $0x318] sm:$0xf]
    %v1221 = vld [vmem:[#allocation2 + $0x31c] sm:$0xf]
    %v1222 = vld [vmem:[#allocation2 + $0x320] sm:$0xf]
    %v1223 = vld [vmem:[#allocation2 + $0x324] sm:$0xf]
    %v1224 = vld [vmem:[#allocation2 + $0x328] sm:$0xf]
    %v1225 = vld [vmem:[#allocation2 + $0x32c] sm:$0xf]
    %v1226 = vld [vmem:[#allocation2 + $0x330] sm:$0xf]
    %v1227 = vld [vmem:[#allocation2 + $0x334] sm:$0xf]
    %v1228 = vld [vmem:[#allocation2 + $0x338] sm:$0xf]
    %v1229 = vld [vmem:[#allocation2 + $0x33c] sm:$0xf]
    %v1230 = vlaneseq
    %v1231 = vshrl.u32 %v1230, 7
    %v1232 = vsub.s32 5, %v1231
    %v1233 = vrot.slane %v45, %v1232
    %v1250 = vunpack.c.l.b16 %v1214
    %v1251 = vunpack.c.l.b16 %v1215
    %v1252 = vunpack.c.l.b16 %v1216
    %v1253 = vunpack.c.l.b16 %v1217
    %v1254 = vunpack.c.l.b16 %v1218
    %v1255 = vunpack.c.l.b16 %v1219
    %v1256 = vunpack.c.l.b16 %v1220
    %v1257 = vunpack.c.l.b16 %v1221
    %v1258 = vunpack.c.l.b16 %v1222
    %v1259 = vunpack.c.l.b16 %v1223
    %v1260 = vunpack.c.l.b16 %v1224
    %v1261 = vunpack.c.l.b16 %v1225
    %v1262 = vunpack.c.l.b16 %v1226
    %v1263 = vunpack.c.l.b16 %v1227
    %v1264 = vunpack.c.l.b16 %v1228
    %v1265 = vunpack.c.l.b16 %v1229
    %v1266 = vpack.c.b16 %v1251, %v1250
    %v1267 = vpack.c.b16 %v1253, %v1252
    %v1268 = vpack.c.b16 %v1255, %v1254
    %v1269 = vpack.c.b16 %v1257, %v1256
    %v1270 = vpack.c.b16 %v1259, %v1258
    %v1271 = vpack.c.b16 %v1261, %v1260
    %v1272 = vpack.c.b16 %v1263, %v1262
    %v1273 = vpack.c.b16 %v1265, %v1264
    %1282 = vmatprep.subr.bf16.mxu0 0
    %1283 = vmatpush1.bf16.msra.mxu0 %v1273
    %1284 = vmatprep.subr.bf16.mxu0 0
    %1285 = vmatpush1.bf16.msra.mxu0 %v1272
    %1286 = vmatprep.subr.bf16.mxu0 0
    %1287 = vmatpush1.bf16.msra.mxu0 %v1271
    %1288 = vmatprep.subr.bf16.mxu0 0
    %1289 = vmatpush1.bf16.msra.mxu0 %v1270
    %1290 = vmatprep.subr.bf16.mxu0 0
    %1291 = vmatpush1.bf16.msra.mxu0 %v1269
    %1292 = vmatprep.subr.bf16.mxu0 0
    %1293 = vmatpush1.bf16.msra.mxu0 %v1268
    %1294 = vmatprep.subr.bf16.mxu0 0
    %1295 = vmatpush1.bf16.msra.mxu0 %v1267
    %1296 = vmatprep.subr.bf16.mxu0 0
    %1297 = vmatpush1.bf16.msra.mxu0 %v1266
    %1298 = vmatprep.subr.bf16.mxu0 0
    %1299 = vmatpush2.bf16.msra.mxu0 0
    %1300 = vmatprep.subr.bf16.mxu0 0
    %1301 = vmatpush2.bf16.msra.mxu0 0
    %1302 = vmatprep.subr.bf16.mxu0 0
    %1303 = vmatpush2.bf16.msra.mxu0 0
    %1304 = vmatprep.subr.bf16.mxu0 0
    %1305 = vmatpush2.bf16.msra.mxu0 0
    %1306 = vmatprep.subr.bf16.mxu0 0
    %1307 = vmatpush2.bf16.msra.mxu0 0
    %1308 = vmatprep.subr.bf16.mxu0 0
    %1309 = vmatpush2.bf16.msra.mxu0 0
    %1310 = vmatprep.subr.bf16.mxu0 0
    %1311 = vmatpush2.bf16.msra.mxu0 0
    %1312 = vmatprep.subr.bf16.mxu0 0
    %1313 = vmatpush2.bf16.msra.mxu0 0
    %1314 = vmatprep.mubr.bf16.mxu0 0
    %1315 = vmatmul.mubr.bf16.gmra.mxu0 %v1213
    %v1316 = vpop.f32.mrf.mxu0
    %v1317 = vadd.f32 %v1233, %v1316
    %v1318 = vpop.f32.mrf.mxu0
    %v1319 = vpop.f32.mrf.mxu0
    %v1320 = vpop.f32.mrf.mxu0
    %1321 = vdwg.mxu0
    %v1322 = vmax.f32 %v1317, 0.0
    %v1323 = vpack.c.bf16 %v1322, %v1322
    %v1324 = vld [vmem:[#allocation2 + $0x340] sm:$0xf]
    %v1325 = vld [vmem:[#allocation2 + $0x344] sm:$0xf]
    %v1326 = vld [vmem:[#allocation2 + $0x348] sm:$0xf]
    %v1327 = vld [vmem:[#allocation2 + $0x34c] sm:$0xf]
    %v1328 = vld [vmem:[#allocation2 + $0x350] sm:$0xf]
    %v1329 = vld [vmem:[#allocation2 + $0x354] sm:$0xf]
    %v1330 = vld [vmem:[#allocation2 + $0x358] sm:$0xf]
    %v1331 = vld [vmem:[#allocation2 + $0x35c] sm:$0xf]
    %v1332 = vld [vmem:[#allocation2 + $0x360] sm:$0xf]
    %v1333 = vld [vmem:[#allocation2 + $0x364] sm:$0xf]
    %v1334 = vld [vmem:[#allocation2 + $0x368] sm:$0xf]
    %v1335 = vld [vmem:[#allocation2 + $0x36c] sm:$0xf]
    %v1336 = vld [vmem:[#allocation2 + $0x370] sm:$0xf]
    %v1337 = vld [vmem:[#allocation2 + $0x374] sm:$0xf]
    %v1338 = vld [vmem:[#allocation2 + $0x378] sm:$0xf]
    %v1339 = vld [vmem:[#allocation2 + $0x37c] sm:$0xf]
    %v1340 = vlaneseq
    %v1341 = vshrl.u32 %v1340, 7
    %v1342 = vsub.s32 6, %v1341
    %v1343 = vrot.slane %v45, %v1342
    %v1360 = vunpack.c.l.b16 %v1324
    %v1361 = vunpack.c.l.b16 %v1325
    %v1362 = vunpack.c.l.b16 %v1326
    %v1363 = vunpack.c.l.b16 %v1327
    %v1364 = vunpack.c.l.b16 %v1328
    %v1365 = vunpack.c.l.b16 %v1329
    %v1366 = vunpack.c.l.b16 %v1330
    %v1367 = vunpack.c.l.b16 %v1331
    %v1368 = vunpack.c.l.b16 %v1332
    %v1369 = vunpack.c.l.b16 %v1333
    %v1370 = vunpack.c.l.b16 %v1334
    %v1371 = vunpack.c.l.b16 %v1335
    %v1372 = vunpack.c.l.b16 %v1336
    %v1373 = vunpack.c.l.b16 %v1337
    %v1374 = vunpack.c.l.b16 %v1338
    %v1375 = vunpack.c.l.b16 %v1339
    %v1376 = vpack.c.b16 %v1361, %v1360
    %v1377 = vpack.c.b16 %v1363, %v1362
    %v1378 = vpack.c.b16 %v1365, %v1364
    %v1379 = vpack.c.b16 %v1367, %v1366
    %v1380 = vpack.c.b16 %v1369, %v1368
    %v1381 = vpack.c.b16 %v1371, %v1370
    %v1382 = vpack.c.b16 %v1373, %v1372
    %v1383 = vpack.c.b16 %v1375, %v1374
    %1392 = vmatprep.subr.bf16.mxu0 0
    %1393 = vmatpush1.bf16.msra.mxu0 %v1383
    %1394 = vmatprep.subr.bf16.mxu0 0
    %1395 = vmatpush1.bf16.msra.mxu0 %v1382
    %1396 = vmatprep.subr.bf16.mxu0 0
    %1397 = vmatpush1.bf16.msra.mxu0 %v1381
    %1398 = vmatprep.subr.bf16.mxu0 0
    %1399 = vmatpush1.bf16.msra.mxu0 %v1380
    %1400 = vmatprep.subr.bf16.mxu0 0
    %1401 = vmatpush1.bf16.msra.mxu0 %v1379
    %1402 = vmatprep.subr.bf16.mxu0 0
    %1403 = vmatpush1.bf16.msra.mxu0 %v1378
    %1404 = vmatprep.subr.bf16.mxu0 0
    %1405 = vmatpush1.bf16.msra.mxu0 %v1377
    %1406 = vmatprep.subr.bf16.mxu0 0
    %1407 = vmatpush1.bf16.msra.mxu0 %v1376
    %1408 = vmatprep.subr.bf16.mxu0 0
    %1409 = vmatpush2.bf16.msra.mxu0 0
    %1410 = vmatprep.subr.bf16.mxu0 0
    %1411 = vmatpush2.bf16.msra.mxu0 0
    %1412 = vmatprep.subr.bf16.mxu0 0
    %1413 = vmatpush2.bf16.msra.mxu0 0
    %1414 = vmatprep.subr.bf16.mxu0 0
    %1415 = vmatpush2.bf16.msra.mxu0 0
    %1416 = vmatprep.subr.bf16.mxu0 0
    %1417 = vmatpush2.bf16.msra.mxu0 0
    %1418 = vmatprep.subr.bf16.mxu0 0
    %1419 = vmatpush2.bf16.msra.mxu0 0
    %1420 = vmatprep.subr.bf16.mxu0 0
    %1421 = vmatpush2.bf16.msra.mxu0 0
    %1422 = vmatprep.subr.bf16.mxu0 0
    %1423 = vmatpush2.bf16.msra.mxu0 0
    %1424 = vmatprep.mubr.bf16.mxu0 0
    %1425 = vmatmul.mubr.bf16.gmra.mxu0 %v1323
    %v1426 = vpop.f32.mrf.mxu0
    %v1427 = vadd.f32 %v1343, %v1426
    %v1428 = vpop.f32.mrf.mxu0
    %v1429 = vpop.f32.mrf.mxu0
    %v1430 = vpop.f32.mrf.mxu0
    %1431 = vdwg.mxu0
    %v1432 = vrot.slane %v1427, 4
    %v1433 = vmax.f32 %v1427, %v1432
    %v1434 = vrot.slane %v1433, 2
    %v1435 = vmax.f32 %v1433, %v1434
    %v1436 = vrot.slane %v1435, 1
    %v1437 = vmax.f32 %v1435, %v1436
    %v1438 = vsub.f32 %v1427, %v1437
    %v1439 = vmul.f32 %v1438, 1.442695
    %v1440 = vpow.pop %v1439
    %v1441 = vrot.slane %v1440, 4
    %v1442 = vadd.f32 %v1440, %v1441
    %v1443 = vrot.slane %v1442, 2
    %v1444 = vadd.f32 %v1442, %v1443
    %v1445 = vrot.slane %v1444, 1
    %v1446 = vadd.f32 %v1444, %v1445
    %v1447 = vrcp.pop %v1446
    %v1448 = vmul.f32 %v1440, %v1447
    %1449 = vst [vmem:[#allocation7] sm:$0xff] %v1448
    // Predicated region
    $region22: #{tpu_custom_call.1} parent=1 // pred_check
      _
    $region23: #{tpu_custom_call.1} parent=1 // pred_check_branch
      %1451 = sbr.rel (0) target = $region25
    $region24: #{tpu_custom_call.1} parent=1 // pred_region
      %s1453 = ssub.s32 128, 128
      %1454 = vsyncadd [#allocation4], %s1453
      %s1456 = sshll.u32 [#allocation7], 4
      %s1457 = int_to_ptr.vmem [resolvable:$true] %s1456
      %1459 = dma.vmem_to_hbm [thread:$0]  %s1457, 128, %s3, [#allocation4]
    $region25: #{tpu_custom_call.1} parent=1 // pred_fallthru
      _
    // Predicated region
    $region26: #{tpu_custom_call.1} parent=1 // pred_check
      _
    $region27: #{tpu_custom_call.1} parent=1 // pred_check_branch
      %1461 = sbr.rel (0) target = $region29
    $region28: #{tpu_custom_call.1} parent=1 // pred_region
      %1462 = dma.done [#allocation4], 128
    $region29: #{tpu_custom_call.1} parent=1 // pred_fallthru
      _
    %1463 = vsyncpa [#allocation3], 1
    %1464 = vsyncpa [#allocation6], 1
    %1465 = vsyncpa [#allocation4], 1

</llo_original>
